<compile_context>
chip_gen: v6e
topology: v6e:2x2x1
jax: 0.10.0
libtpu: 0.0.40
codegen_flags: <defaults>
</compile_context>

<pallas_src>
import functools

import jax
import jax.numpy as jnp
from jax.experimental import pallas as pl
from jax.experimental.pallas import tpu as pltpu


def _focal_loss_kernel(logits_ref, targets_ref, out_ref, *,
                       gamma, alpha, n_valid, tile_n, tiles_per_split):
    s = pl.program_id(0)   # core split axis ("parallel")
    i = pl.program_id(1)   # row-tile within the split ("arbitrary" / reduction axis)

    @pl.when(i == 0)
    def _():
        out_ref[...] = jnp.zeros_like(out_ref)

    logits = logits_ref[...].astype(jnp.float32)        # (tile_n, C) upcast in VMEM
    tgt = targets_ref[...]                               # (tile_n, 1) int32

    # Numerically stable log-softmax pieces (all per-row, keepdims to stay lane-major).
    row_max = jnp.max(logits, axis=-1, keepdims=True)
    shifted = logits - row_max
    lse = jnp.log(jnp.sum(jnp.exp(shifted), axis=-1, keepdims=True))     # (tile_n, 1)

    # Gather the (shifted) target logit via a lane-iota compare (no cross-lane gather).
    col_ids = jax.lax.broadcasted_iota(jnp.int32, logits.shape, 1)
    logit_t = jnp.sum(jnp.where(col_ids == tgt, shifted, 0.0),
                      axis=-1, keepdims=True)                            # (tile_n, 1)

    ce = lse - logit_t                                   # per-sample CE, >= 0
    pt = jnp.exp(-ce)
    one_minus_pt = 1.0 - pt
    if float(gamma) == 2.0:
        w = one_minus_pt * one_minus_pt                  # avoid pow for the default gamma
    elif float(gamma) == 1.0:
        w = one_minus_pt
    elif float(gamma) == 0.0:
        w = jnp.ones_like(one_minus_pt)
    else:
        w = jnp.power(one_minus_pt, jnp.float32(gamma))
    fl = w * ce

    if alpha is not None:
        alpha_w = jnp.where(tgt == 0, jnp.float32(1.0 - alpha), jnp.float32(alpha))
        fl = alpha_w * fl

    # Mask rows that are padding (partial last block) or belong to a clamped overflow
    # tile of this split. Must stay a select (not a multiply): garbage rows may be NaN.
    row_start = (s * tiles_per_split + i) * tile_n
    row_ids = row_start + jax.lax.broadcasted_iota(jnp.int32, fl.shape, 0)
    fl = jnp.where(row_ids < n_valid, fl, 0.0)

    # Per-split partial sum accumulated in the resident (1,1,1) VMEM output block.
    out_ref[...] += jnp.sum(fl, axis=0, keepdims=True)[None]


def focal_loss(logits: jax.Array, targets: jax.Array, gamma: float = 2.0,
               alpha=None, reduction: str = 'mean', block_rows: int | None = None,
               target_block_bytes: int = 4 * 1024 * 1024) -> jax.Array:
    """logits: (N, C) float; targets: (N,) int. Returns a scalar ('mean'/'sum')."""
    if reduction not in ('mean', 'sum'):
        # TODO(synk): reduction='none' (per-sample (N,) vector output) not implemented.
        raise NotImplementedError(f"Unsupported reduction: {reduction}")

    N, C = logits.shape
    c_lanes = ((C + 127) // 128) * 128                      # VMEM lane padding of a block
    itemsize = jnp.dtype(logits.dtype).itemsize

    # Auto-size the row tile so one logits block is ~target_block_bytes of VMEM
    # (as stored, i.e. lane-padded), then round to a multiple of 8 sublanes and
    # clamp to the (rounded) row count.
    if block_rows is None:
        block_rows = max(8, target_block_bytes // (c_lanes * itemsize))
    tile_n = int(block_rows)
    tile_n = min(tile_n, ((N + 7) // 8) * 8)
    tile_n = max(8, (tile_n // 8) * 8)

    n_tiles = pl.cdiv(N, tile_n)
    n_split = 2 if n_tiles >= 2 else 1                      # 2-way split feeds both TCs on v7x
    tiles_per_split = pl.cdiv(n_tiles, n_split)

    def row_block_map(s, i):
        # Clamp so overflow tiles of the last split re-read a valid block; their rows
        # are fully masked in-kernel via the global row-id check.
        blk = jnp.minimum(s * tiles_per_split + i, n_tiles - 1)
        return (blk, 0)

    targets_i32 = targets.astype(jnp.int32).reshape(N, 1)   # tiny O(N) reshape only

    kernel = functools.partial(
        _focal_loss_kernel,
        gamma=float(gamma),
        alpha=None if alpha is None else float(alpha),
        n_valid=N,
        tile_n=tile_n,
        tiles_per_split=tiles_per_split,
    )

    partials = pl.pallas_call(
        kernel,
        grid=(n_split, tiles_per_split),
        in_specs=[
            pl.BlockSpec((tile_n, C), row_block_map),        # logits rows (HBM dtype)
            pl.BlockSpec((tile_n, 1), row_block_map),        # targets as (N, 1) int32
        ],
        out_specs=pl.BlockSpec((1, 1, 1), lambda s, i: (s, 0, 0)),
        out_shape=jax.ShapeDtypeStruct((n_split, 1, 1), jnp.float32),
        compiler_params=pltpu.CompilerParams(
            dimension_semantics=("parallel", "arbitrary"),
            vmem_limit_bytes=48 * 1024 * 1024,
        ),
    )(logits, targets_i32)

    total = jnp.sum(partials)
    if reduction == 'mean':
        return total / jnp.float32(N)
    return total


def _reference(logits, targets, gamma=2.0, alpha=None, reduction='mean'):
    logits = logits.astype(jnp.float32)
    lse = jax.scipy.special.logsumexp(logits, axis=-1)
    logit_t = jnp.take_along_axis(logits, targets[:, None].astype(jnp.int32), axis=-1)[:, 0]
    ce = lse - logit_t
    pt = jnp.exp(-ce)
    fl = (1.0 - pt) ** gamma * ce
    if alpha is not None:
        w = jnp.where(targets == 0, 1.0 - alpha, alpha)
        fl = w * fl
    if reduction == 'mean':
        return fl.mean()
    if reduction == 'sum':
        return fl.sum()
    return fl


if __name__ == "__main__":
    key = jax.random.PRNGKey(0)
    k1, k2, k3, k4, k5, k6 = jax.random.split(key, 6)

    # 1) Default config: gamma=2.0, alpha=None, reduction='mean' (single tile).
    N, C = 8, 32
    logits = jax.random.normal(k1, (N, C), dtype=jnp.float32)
    targets = jax.random.randint(k2, (N,), 0, C, dtype=jnp.int32)
    loss = focal_loss(logits, targets, gamma=2.0, alpha=None, reduction='mean')
    jax.block_until_ready(loss)
    ref = _reference(logits, targets, gamma=2.0, alpha=None, reduction='mean')
    assert jnp.allclose(loss, ref, rtol=1e-5, atol=1e-6), (loss, ref)

    # 2) alpha weighting + 'sum' + a partial (unpadded) block: N not a multiple of 8.
    N2, C2 = 20, 16
    logits2 = jax.random.normal(k3, (N2, C2), dtype=jnp.float32)
    targets2 = jax.random.randint(k4, (N2,), 0, C2, dtype=jnp.int32)
    loss2 = focal_loss(logits2, targets2, gamma=2.0, alpha=0.25, reduction='sum')
    jax.block_until_ready(loss2)
    ref2 = _reference(logits2, targets2, gamma=2.0, alpha=0.25, reduction='sum')
    assert jnp.allclose(loss2, ref2, rtol=1e-5, atol=1e-5), (loss2, ref2)

    # 3) Multi-tile grid with the 2-way "parallel" split, a partial last block and a
    #    clamped overflow tile (block_rows forced small to exercise the path).
    N3, C3 = 300, 40
    logits3 = jax.random.normal(k5, (N3, C3), dtype=jnp.float32)
    targets3 = jax.random.randint(k6, (N3,), 0, C3, dtype=jnp.int32)
    loss3 = focal_loss(logits3, targets3, gamma=2.0, alpha=0.25, reduction='mean',
                       block_rows=64)
    jax.block_until_ready(loss3)
    ref3 = _reference(logits3, targets3, gamma=2.0, alpha=0.25, reduction='mean')
    assert jnp.allclose(loss3, ref3, rtol=1e-5, atol=1e-5), (loss3, ref3)

    print("KERNEL_OK")
</pallas_src>

<mosaic_0001>
module attributes {stable_mosaic.version = 11 : i64} {
  func.func @_focal_loss_kernel(%arg0: i32, %arg1: i32, %arg2: memref<8x32xf32, #tpu.memory_space<vmem>>, %arg3: memref<8x1xi32, #tpu.memory_space<vmem>>, %arg4: memref<1x1x1xf32, #tpu.memory_space<vmem>>) attributes {dimension_semantics = [#tpu.dimension_semantics<parallel>, #tpu.dimension_semantics<arbitrary>], iteration_bounds = array<i64: 1, 1>, scalar_prefetch = 0 : i64, scratch_operands = 0 : i64, tpu.core_type = #tpu.core_type<tc>, window_params = [{transform_indices = @transform_0, window_bounds = array<i64: 8, 32>}, {transform_indices = @transform_1, window_bounds = array<i64: 8, 1>}, {transform_indices = @transform_2, window_bounds = array<i64: 1, 1, 1>}]} {
    %c0_i32 = arith.constant 0 : i32
    %0 = arith.cmpi eq, %arg1, %c0_i32 : i32
    %1 = arith.extui %0 : i1 to i32
    %c0_i32_0 = arith.constant 0 : i32
    %2 = arith.cmpi ne, %1, %c0_i32_0 : i32
    scf.if %2 {
      %cst_18 = arith.constant 0.000000e+00 : f32
      %44 = vector.broadcast %cst_18 : f32 to vector<1x1x1xf32>
      %c0_19 = arith.constant 0 : index
      %c0_20 = arith.constant 0 : index
      %c0_21 = arith.constant 0 : index
      %45 = vector.load %arg4[%c0_19, %c0_20, %c0_21] : memref<1x1x1xf32, #tpu.memory_space<vmem>>, vector<1x1x1xf32>
      tpu.vector_store %arg4[%c0_19, %c0_20, %c0_21], %44 {strides = array<i32>} : memref<1x1x1xf32, #tpu.memory_space<vmem>>, vector<1x1x1xf32>,
    } else {
    }
    %c0 = arith.constant 0 : index
    %c0_1 = arith.constant 0 : index
    %3 = vector.load %arg2[%c0, %c0_1] : memref<8x32xf32, #tpu.memory_space<vmem>>, vector<8x32xf32>
    %c0_2 = arith.constant 0 : index
    %c0_3 = arith.constant 0 : index
    %4 = vector.load %arg3[%c0_2, %c0_3] : memref<8x1xi32, #tpu.memory_space<vmem>>, vector<8x1xi32>
    %cst = arith.constant dense<0xFF800000> : vector<8xf32>
    %5 = vector.multi_reduction <maximumf>, %3, %cst [1] : vector<8x32xf32> to vector<8xf32>
    %6 = vector.shape_cast %5 : vector<8xf32> to vector<8x1xf32>
    %7 = vector.broadcast %6 : vector<8x1xf32> to vector<8x32xf32>
    %8 = arith.subf %3, %7 : vector<8x32xf32>
    %9 = math.exp %8 : vector<8x32xf32>
    %cst_4 = arith.constant dense<0.000000e+00> : vector<8xf32>
    %10 = vector.multi_reduction <add>, %9, %cst_4 [1] : vector<8x32xf32> to vector<8xf32>
    %11 = vector.shape_cast %10 : vector<8xf32> to vector<8x1xf32>
    %12 = math.log %11 : vector<8x1xf32>
    %13 = tpu.iota {dimensions = array<i32: 1>} : vector<8x32xi32>
    %14 = vector.broadcast %4 : vector<8x1xi32> to vector<8x32xi32>
    %15 = arith.cmpi eq, %13, %14 : vector<8x32xi32>
    %cst_5 = arith.constant 0.000000e+00 : f32
    %16 = vector.broadcast %cst_5 : f32 to vector<8x32xf32>
    %17 = arith.select %15, %8, %16 : vector<8x32xi1>, vector<8x32xf32>
    %cst_6 = arith.constant dense<0.000000e+00> : vector<8xf32>
    %18 = vector.multi_reduction <add>, %17, %cst_6 [1] : vector<8x32xf32> to vector<8xf32>
    %19 = vector.shape_cast %18 : vector<8xf32> to vector<8x1xf32>
    %20 = arith.subf %12, %19 : vector<8x1xf32>
    %cst_7 = arith.constant 0.000000e+00 : f32
    %21 = vector.broadcast %cst_7 : f32 to vector<8x1xf32>
    %22 = arith.subf %21, %20 : vector<8x1xf32>
    %23 = math.exp %22 : vector<8x1xf32>
    %cst_8 = arith.constant 1.000000e+00 : f32
    %24 = vector.broadcast %cst_8 : f32 to vector<8x1xf32>
    %25 = arith.subf %24, %23 : vector<8x1xf32>
    %26 = arith.mulf %25, %25 : vector<8x1xf32>
    %27 = arith.mulf %26, %20 : vector<8x1xf32>
    %c1_i32 = arith.constant 1 : i32
    %28 = arith.muli %arg0, %c1_i32 : i32
    %29 = arith.addi %28, %arg1 : i32
    %c8_i32 = arith.constant 8 : i32
    %30 = arith.muli %29, %c8_i32 : i32
    %31 = tpu.iota {dimensions = array<i32: 0>} : vector<8x1xi32>
    %32 = vector.broadcast %30 : i32 to vector<8x1xi32>
    %33 = arith.addi %32, %31 : vector<8x1xi32>
    %c8_i32_9 = arith.constant 8 : i32
    %34 = vector.broadcast %c8_i32_9 : i32 to vector<8x1xi32>
    %35 = arith.cmpi slt, %33, %34 : vector<8x1xi32>
    %cst_10 = arith.constant 0.000000e+00 : f32
    %36 = vector.broadcast %cst_10 : f32 to vector<8x1xf32>
    %37 = arith.select %35, %27, %36 : vector<8x1xi1>, vector<8x1xf32>
    %c0_11 = arith.constant 0 : index
    %c0_12 = arith.constant 0 : index
    %c0_13 = arith.constant 0 : index
    %38 = vector.load %arg4[%c0_11, %c0_12, %c0_13] : memref<1x1x1xf32, #tpu.memory_space<vmem>>, vector<1x1x1xf32>
    %cst_14 = arith.constant dense<0.000000e+00> : vector<1xf32>
    %39 = vector.multi_reduction <add>, %37, %cst_14 [0] : vector<8x1xf32> to vector<1xf32>
    %40 = vector.shape_cast %39 : vector<1xf32> to vector<1x1xf32>
    %41 = vector.shape_cast %40 : vector<1x1xf32> to vector<1x1x1xf32>
    %42 = arith.addf %38, %41 : vector<1x1x1xf32>
    %c0_15 = arith.constant 0 : index
    %c0_16 = arith.constant 0 : index
    %c0_17 = arith.constant 0 : index
    %43 = vector.load %arg4[%c0_15, %c0_16, %c0_17] : memref<1x1x1xf32, #tpu.memory_space<vmem>>, vector<1x1x1xf32>
    tpu.vector_store %arg4[%c0_15, %c0_16, %c0_17], %42 {strides = array<i32>} : memref<1x1x1xf32, #tpu.memory_space<vmem>>, vector<1x1x1xf32>,
    return
  }
  func.func @transform_0(%arg0: i32, %arg1: i32) -> (i32, i32) {
    %c1_i32 = arith.constant 1 : i32
    %0 = arith.muli %arg0, %c1_i32 : i32
    %1 = arith.addi %0, %arg1 : i32
    %c0_i32 = arith.constant 0 : i32
    %2 = arith.minsi %1, %c0_i32 : i32
    %c0_i32_0 = arith.constant 0 : i32
    %c0_i32_1 = arith.constant 0 : i32
    return %2, %c0_i32_0 : i32, i32
  }
  func.func @transform_1(%arg0: i32, %arg1: i32) -> (i32, i32) {
    %c1_i32 = arith.constant 1 : i32
    %0 = arith.muli %arg0, %c1_i32 : i32
    %1 = arith.addi %0, %arg1 : i32
    %c0_i32 = arith.constant 0 : i32
    %2 = arith.minsi %1, %c0_i32 : i32
    %c0_i32_0 = arith.constant 0 : i32
    %c0_i32_1 = arith.constant 0 : i32
    return %2, %c0_i32_0 : i32, i32
  }
  func.func @transform_2(%arg0: i32, %arg1: i32) -> (i32, i32, i32) {
    %c0_i32 = arith.constant 0 : i32
    %c0_i32_0 = arith.constant 0 : i32
    %c0_i32_1 = arith.constant 0 : i32
    return %arg0, %c0_i32, %c0_i32_0 : i32, i32, i32
  }
}

</mosaic_0001>

<llo_original>
// kernel: tpu_custom_call.1
$region0: #{tpu_custom_call.1}
  #allocation0 [shape = 'u32[]', space=smem, size = 0x4, offset = 0x4, fixed_abs, tag = 'smem constant byte address 0x4 - core index']
  #allocation1 [shape = 'u32[144,128]{1,0:T(1,128)}', space=vmem, size = 0x12000, scoped, tag = 'internal scratch']
  %s0 = inlined_call_operand.vmem [shape: f32[8,32], index: 0, kind: input, shape index: {}]
  %s1 = inlined_call_operand.vmem [shape: s32[8,1], index: 1, kind: input, shape index: {}]
  %s2 = inlined_call_operand.hbm [shape: f32[1,1,1], index: 2, kind: output, shape index: {}]
  %s3 = sld [smem:[#allocation0]]
  $region22: #{tpu_custom_call.1} parent=0
    _
  %s5 = ssub.s32 1, %s3
  %s6 = scalar_select 0, %s5, %s3
  $region1: #{tpu_custom_call.1} parent=0
    #allocation2 [shape = 'u8[512]{0}', space=vmem, size = 0x400, scoped, tag = 'output window, operand 0, single buffered']
    #allocation3 [shape = 's32[1]{0}', space=sflag, size = 0x4, scoped, tag = 'scoped memory for tpu_custom_call.1']
    %7 = vsyncpa [#allocation3], 0
    // Predicated region
    $region2: #{tpu_custom_call.1} parent=1 // pred_check
      _
    $region3: #{tpu_custom_call.1} parent=1 // pred_check_branch
      %9 = sbr.rel (0) target = $region5
    $region4: #{tpu_custom_call.1} parent=1 // pred_region
      %s10 = sadd.s32 0, 0
      %p11 = scmp.lt.s32.totalorder %s10, 0
      %s12 = scalar_select %p11, %s10, 0
      %p13 = scmp.lt.s32.totalorder %s12, 0
      %s14 = scalar_select %p13, %s12, 0
      %s15 = smul.addr %s14, 8
      %s16 = scalar_lea.vmem %s0, %s15
      %s17 = sadd.s32 0, 0
      %p18 = scmp.lt.s32.totalorder %s17, 0
      %s19 = scalar_select %p18, %s17, 0
    $region5: #{tpu_custom_call.1} parent=1 // pred_fallthru
      _
    // Predicated region
    $region6: #{tpu_custom_call.1} parent=1 // pred_check
      _
    $region7: #{tpu_custom_call.1} parent=1 // pred_check_branch
      %21 = sbr.rel (0) target = $region9
    $region8: #{tpu_custom_call.1} parent=1 // pred_region
      %s22 = sadd.s32 0, 0
      %p23 = scmp.lt.s32.totalorder %s22, 0
      %s24 = scalar_select %p23, %s22, 0
      %p25 = scmp.lt.s32.totalorder %s24, 0
      %s26 = scalar_select %p25, %s24, 0
      %s27 = smul.addr %s26, 8
      %s28 = scalar_lea.vmem %s1, %s27
      %s29 = sadd.s32 0, 0
      %p30 = scmp.lt.s32.totalorder %s29, 0
      %s31 = scalar_select %p30, %s29, 0
    $region9: #{tpu_custom_call.1} parent=1 // pred_fallthru
      _
    %s32 = sadd.s32 0, 0
    %p33 = scmp.lt.s32.totalorder %s32, 0
    %s34 = scalar_select %p33, %s32, 0
    %p35 = scmp.lt.s32.totalorder %s34, 0
    %s36 = scalar_select %p35, %s34, 0
    %s37 = smul.addr %s36, 8
    %s38 = scalar_lea.vmem %s0, %s37
    %s39 = sadd.s32 0, 0
    %p40 = scmp.lt.s32.totalorder %s39, 0
    %s41 = scalar_select %p40, %s39, 0
    %p42 = scmp.lt.s32.totalorder %s41, 0
    %s43 = scalar_select %p42, %s41, 0
    %s44 = smul.addr %s43, 8
    %s45 = scalar_lea.vmem %s1, %s44
    %s46 = sadd.s32 0, 0
    %p47 = scmp.lt.s32.totalorder %s46, 0
    %s48 = scalar_select %p47, %s46, 0
    %p49 = scmp.lt.s32.totalorder %s48, 0
    %s50 = scalar_select %p49, %s48, 0
    %s51 = smul.addr %s50, 8
    %s52 = scalar_lea.vmem %s0, %s51
    %s53 = sadd.s32 0, 0
    %p54 = scmp.lt.s32.totalorder %s53, 0
    %s55 = scalar_select %p54, %s53, 0
    %s56 = sadd.s32 0, 0
    %p57 = scmp.lt.s32.totalorder %s56, 0
    %s58 = scalar_select %p57, %s56, 0
    %p59 = scmp.lt.s32.totalorder %s58, 0
    %s60 = scalar_select %p59, %s58, 0
    %s61 = smul.addr %s60, 8
    %s62 = scalar_lea.vmem %s1, %s61
    %s63 = sadd.s32 0, 0
    %p64 = scmp.lt.s32.totalorder %s63, 0
    %s65 = scalar_select %p64, %s63, 0
    %p66 = scmp.eq.s32.totalorder 0, 0
    // Predicated region
    $region10: #{tpu_custom_call.1} parent=1 // pred_check
      %p67 = pneg %p66
    $region11: #{tpu_custom_call.1} parent=1 // pred_check_branch
      %69 = sbr.rel (%p67) target = $region13
    $region12: #{tpu_custom_call.1} parent=1 // pred_region
      %vm70 = vcmask 0
      %71 = vst.msk [vmem:[#allocation2] sm:$0x1] %vm70, 0.0
    $region13: #{tpu_custom_call.1} parent=1 // pred_fallthru
      _
    %v72 = vld [vmem:[%s52] sm:$0xff]
    %v73 = vld [vmem:[%s62] sm:$0xff]
    %vm74 = vcmask 261120
    %v75 = vsel %vm74, %v72, -inf
    %76 = vmax.xlane.f32.xlu0 %v75
    %v77 = vpop.xlane.xlu0 %76
    %v78 = vsub.f32 %v72, %v77
    %v79 = vmul.f32 %v78, 1.442695
    %v80 = vpow.pop %v79
    %v81 = vsel %vm74, %v80, 0.0
    %82 = vadd.xlane.f32.xlu0 %v81
    %v83 = vpop.xlane.xlu0 %82
    %v84 = vlog2.pop %v83
    %v85 = vmul.f32 %v84, 0.6931472
    %v86 = vlaneseq
    %v87 = vand.u32 %v86, 127
    %88 = vset.pattern.permute.xlu0 0
    %89 = vperm.xlu0 %88, %v73
    %v90 = vpop.permute.xlu0 %89
    %vm91 = vcmp.eq.s32.totalorder %v87, %v90
    %v92 = vsel %vm91, %v78, 0.0
    %v93 = vsel %vm74, %v92, 0.0
    %94 = vadd.xlane.f32.xlu0 %v93
    %v95 = vpop.xlane.xlu0 %94
    %v96 = vsub.f32 %v85, %v95
    %v97 = vsub.f32 0.0, %v96
    %v98 = vmul.f32 %v97, 1.442695
    %v99 = vpow.pop %v98
    %v100 = vsub.f32 1.0, %v99
    %v101 = vmul.f32 %v100, %v100
    %v102 = vmul.f32 %v101, %v96
    %s103 = sadd.s32 0, 0
    %s104 = smul.u32 %s103, 8
    %v105 = vlaneseq
    %v106 = vshrl.u32 %v105, 7
    %v107 = vstv %s104
    %v108 = vadd.s32 %v107, %v106
    %vm109 = vcmp.lt.s32.totalorder %v108, 8
    %v110 = vsel %vm109, %v102, 0.0
    %v111 = vld [vmem:[#allocation2] sm:$0x1]
    %v112 = vrot.slane %v110, 4
    %v113 = vadd.f32 %v110, %v112
    %v114 = vrot.slane %v113, 2
    %v115 = vadd.f32 %v113, %v114
    %v116 = vrot.slane %v115, 1
    %v117 = vadd.f32 %v115, %v116
    %v118 = vadd.f32 %v111, %v117
    %vm119 = vcmask 0
    %120 = vst.msk [vmem:[#allocation2] sm:$0x1] %vm119, %v118
    // Predicated region
    $region14: #{tpu_custom_call.1} parent=1 // pred_check
      _
    $region15: #{tpu_custom_call.1} parent=1 // pred_check_branch
      %122 = sbr.rel (0) target = $region17
    $region16: #{tpu_custom_call.1} parent=1 // pred_region
      %s124 = ssub.s32 16, 16
      %125 = vsyncadd [#allocation3], %s124
      %s127 = sshll.u32 [#allocation2], 4
      %s128 = int_to_ptr.vmem [resolvable:$true] %s127
      %130 = dma.vmem_to_hbm [thread:$0]  %s128, 16, %s2, [#allocation3]
    $region17: #{tpu_custom_call.1} parent=1 // pred_fallthru
      _
    // Predicated region
    $region18: #{tpu_custom_call.1} parent=1 // pred_check
      _
    $region19: #{tpu_custom_call.1} parent=1 // pred_check_branch
      %132 = sbr.rel (0) target = $region21
    $region20: #{tpu_custom_call.1} parent=1 // pred_region
      %133 = dma.done [#allocation3], 16
    $region21: #{tpu_custom_call.1} parent=1 // pred_fallthru
      _
    %134 = vsyncpa [#allocation3], 1

</llo_original>
